<compile_context>
chip_gen: v7x
topology: tpu7x:2x2x1
jax: 0.10.0
libtpu: 0.0.40
codegen_flags: <defaults>
</compile_context>

<pallas_src>
import jax
import jax.numpy as jnp
from jax.experimental import pallas as pl
from jax.experimental.pallas import tpu as pltpu


_TILE_BUDGET_BYTES = 16 << 20   # per X tile; double-buffered => ~32 MiB
_VMEM_LIMIT_BYTES = 48 << 20    # explicit scoped-VMEM limit (v7x physical = 64 MiB)
_MAX_SPLIT_TILE_D = 8192        # bound on tile_d when d must be split (bounds unroll)


def _round_up(x, m):
    return ((x + m - 1) // m) * m


def _sublane_multiple(itemsize):
    # Packed sublane multiple: 8 for 4-byte, 16 for 2-byte, 32 for 1-byte dtypes.
    return max(8, 32 // max(1, itemsize))


def _choose_tiles(N, d, itemsize):
    """Pick (tile_n, tile_d) for a bandwidth-bound (N, d) x (d,) GEMV."""
    sub = _sublane_multiple(itemsize)
    budget = _TILE_BUDGET_BYTES

    # --- contraction tile: keep full d (row-contiguous DMA, no k grid axis)
    # unless even a minimal `sub`-row sliver at full d blows the budget.  Only
    # split when d factors cleanly into multiples of 128 so padded lanes can
    # never contaminate the reduction.
    tile_d = d
    if sub * d * itemsize > budget and d % 128 == 0:
        max_td = (budget // (sub * itemsize)) // 128 * 128
        max_td = max(128, min(_MAX_SPLIT_TILE_D, max_td))
        for cand in range(max_td, 127, -128):
            if d % cand == 0:
                tile_d = cand
                break
        else:  # unreachable (128 always divides d here); kept as safety net
            tile_d = 128

    # --- row tile: as large as the budget allows, but keep >= ~4 row tiles for
    # big N so the "parallel" row axis shards across v7x's 2 TensorCores
    # (harmless on v5e/v6e); never shrink tiles below ~1024 rows just for that.
    n_pad = _round_up(N, sub)
    rows_budget = max(sub, (budget // (tile_d * itemsize)) // sub * sub)
    rows_parallel = max(sub, _round_up(pl.cdiv(N, 4), sub))
    rows_floor = min(n_pad, 1024)
    tile_n = min(n_pad, rows_budget, max(rows_parallel, rows_floor))
    tile_n = max(sub, (tile_n // sub) * sub)
    return tile_n, tile_d


def _linear_kernel_full_d(x_ref, w_ref, o_ref):
    # One contiguous (tile_n, d) DMA per grid step; single broadcast multiply
    # (VPU) + one cross-lane reduce (XLU), fully hidden under the DMA.
    # TODO(synk): if compute ever surfaces (bf16 on v5e/v7x), route this through
    # the otherwise-idle MXU via lax.dot_general contracting the last dims.
    x = x_ref[...].astype(jnp.float32)
    w = w_ref[...].astype(jnp.float32)
    o_ref[...] = jnp.sum(x * w, axis=-1, keepdims=True).astype(o_ref.dtype)


def _linear_kernel_split_d(x_ref, w_ref, o_ref, acc_ref):
    # Rare safety-net path (only when even an 8-row full-d sliver blows VMEM).
    # Weight stays fully resident; accumulator is lane-dense (tile_n, 128) so
    # per-step work is pure 128-lane-aligned VPU adds; the single cross-lane
    # reduce + narrow (tile_n, 1) store happen only on the last k step.
    k = pl.program_id(1)
    tile_d = x_ref.shape[-1]  # static; multiple of 128 by construction

    @pl.when(k == 0)
    def _():
        acc_ref[...] = jnp.zeros_like(acc_ref)

    start = pl.multiple_of(k * tile_d, 128)
    x = x_ref[...].astype(jnp.float32)
    w = w_ref[:, pl.ds(start, tile_d)].astype(jnp.float32)
    prod = x * w                                  # (tile_n, tile_d)
    partial = prod[:, 0:128]
    for c in range(1, tile_d // 128):             # static, lane-aligned VPU adds
        partial = partial + prod[:, c * 128:(c + 1) * 128]
    acc_ref[...] += partial

    @pl.when(k == pl.num_programs(1) - 1)
    def _():
        o_ref[...] = jnp.sum(acc_ref[...], axis=-1, keepdims=True).astype(o_ref.dtype)


def the_linear_forward(x, w):
    """x: (N, d), w: (1, d) (nn.Linear weight layout, bias=False) -> (N, 1)."""
    N, d = x.shape
    assert w.shape == (1, d)
    itemsize = jnp.dtype(x.dtype).itemsize
    tile_n, tile_d = _choose_tiles(N, d, itemsize)
    n_tiles = pl.cdiv(N, tile_n)

    cost = pl.CostEstimate(
        flops=2 * N * d,
        transcendentals=0,
        bytes_accessed=itemsize * (N * d + d + N),
    )
    compiler_params = pltpu.CompilerParams(
        dimension_semantics=("parallel",) if tile_d == d else ("parallel", "arbitrary"),
        vmem_limit_bytes=_VMEM_LIMIT_BYTES,
    )

    if tile_d == d:
        grid_spec = pltpu.PrefetchScalarGridSpec(
            num_scalar_prefetch=0,
            grid=(n_tiles,),
            in_specs=[
                pl.BlockSpec((tile_n, d), lambda i: (i, 0)),
                pl.BlockSpec((1, d), lambda i: (0, 0)),       # weight resident
            ],
            out_specs=pl.BlockSpec((tile_n, 1), lambda i: (i, 0)),
        )
        kernel = _linear_kernel_full_d
    else:
        k_tiles = pl.cdiv(d, tile_d)
        grid_spec = pltpu.PrefetchScalarGridSpec(
            num_scalar_prefetch=0,
            grid=(n_tiles, k_tiles),
            in_specs=[
                pl.BlockSpec((tile_n, tile_d), lambda i, k: (i, k)),
                pl.BlockSpec((1, d), lambda i, k: (0, 0)),    # weight resident
            ],
            out_specs=pl.BlockSpec((tile_n, 1), lambda i, k: (i, 0)),
            scratch_shapes=[pltpu.VMEM((tile_n, 128), jnp.float32)],
        )
        kernel = _linear_kernel_split_d

    return pl.pallas_call(
        kernel,
        out_shape=jax.ShapeDtypeStruct((N, 1), x.dtype),
        grid_spec=grid_spec,
        compiler_params=compiler_params,
        cost_estimate=cost,
    )(x, w)


if __name__ == "__main__":
    key = jax.random.PRNGKey(0)
    kx, kw = jax.random.split(key)

    N, d = 8, 32  # small shapes consistent with the module (Linear(d, 1))
    x = jax.random.normal(kx, (N, d), dtype=jnp.float32)

    # Deterministic parameter init mimicking nn.Linear's uniform(-1/sqrt(d), 1/sqrt(d)).
    bound = 1.0 / (d ** 0.5)
    w = jax.random.uniform(kw, (1, d), dtype=jnp.float32, minval=-bound, maxval=bound)

    out = the_linear_forward(x, w)
    jax.block_until_ready(out)

    # Reference check (same semantics as torch nn.Linear(d, 1, bias=False)).
    ref = x @ w.T
    assert out.shape == (N, 1)
    assert jnp.allclose(out, ref, atol=1e-5, rtol=1e-5)
    print("KERNEL_OK")
</pallas_src>

<mosaic_0001>
module attributes {stable_mosaic.version = 11 : i64} {
  func.func @_linear_kernel_full_d(%arg0: i32, %arg1: memref<8x32xf32, #tpu.memory_space<vmem>>, %arg2: memref<1x32xf32, #tpu.memory_space<vmem>>, %arg3: memref<8x1xf32, #tpu.memory_space<vmem>>) attributes {dimension_semantics = [#tpu.dimension_semantics<parallel>], iteration_bounds = array<i64: 1>, scalar_prefetch = 0 : i64, scratch_operands = 0 : i64, tpu.core_type = #tpu.core_type<tc>, window_params = [{transform_indices = @transform_0, window_bounds = array<i64: 8, 32>}, {pipeline_mode = #tpu.pipeline_mode<synchronous>, transform_indices = @transform_1, window_bounds = array<i64: 1, 32>}, {transform_indices = @transform_2, window_bounds = array<i64: 8, 1>}]} {
    %c0 = arith.constant 0 : index
    %c0_0 = arith.constant 0 : index
    %0 = vector.load %arg1[%c0, %c0_0] : memref<8x32xf32, #tpu.memory_space<vmem>>, vector<8x32xf32>
    %c0_1 = arith.constant 0 : index
    %c0_2 = arith.constant 0 : index
    %1 = vector.load %arg2[%c0_1, %c0_2] : memref<1x32xf32, #tpu.memory_space<vmem>>, vector<1x32xf32>
    %2 = vector.broadcast %1 : vector<1x32xf32> to vector<8x32xf32>
    %3 = arith.mulf %0, %2 : vector<8x32xf32>
    %cst = arith.constant dense<0.000000e+00> : vector<8xf32>
    %4 = vector.multi_reduction <add>, %3, %cst [1] : vector<8x32xf32> to vector<8xf32>
    %5 = vector.shape_cast %4 : vector<8xf32> to vector<8x1xf32>
    %c0_3 = arith.constant 0 : index
    %c0_4 = arith.constant 0 : index
    %6 = vector.load %arg3[%c0_3, %c0_4] : memref<8x1xf32, #tpu.memory_space<vmem>>, vector<8x1xf32>
    tpu.vector_store %arg3[%c0_3, %c0_4], %5 {strides = array<i32>} : memref<8x1xf32, #tpu.memory_space<vmem>>, vector<8x1xf32>,
    return
  }
  func.func @transform_0(%arg0: i32) -> (i32, i32) {
    %c0_i32 = arith.constant 0 : i32
    %c0_i32_0 = arith.constant 0 : i32
    return %arg0, %c0_i32 : i32, i32
  }
  func.func @transform_1(%arg0: i32) -> (i32, i32) {
    %c0_i32 = arith.constant 0 : i32
    %c0_i32_0 = arith.constant 0 : i32
    %c0_i32_1 = arith.constant 0 : i32
    return %c0_i32, %c0_i32_0 : i32, i32
  }
  func.func @transform_2(%arg0: i32) -> (i32, i32) {
    %c0_i32 = arith.constant 0 : i32
    %c0_i32_0 = arith.constant 0 : i32
    return %arg0, %c0_i32 : i32, i32
  }
}

</mosaic_0001>

<llo_original>
// kernel: tpu_custom_call.1
$region0: #{tpu_custom_call.1}
  #allocation0 [shape = 'u32[]', space=smem, size = 0x4, offset = 0x4, fixed_abs, tag = 'smem constant byte address 0x4 - core index']
  #allocation1 [shape = 'u32[144,128]{1,0:T(1,128)}', space=vmem, size = 0x12000, scoped, tag = 'internal scratch']
  %s0 = inlined_call_operand.hbm [shape: f32[8,32], index: 0, kind: input, shape index: {}]
  %s1 = inlined_call_operand.vmem [shape: f32[1,32], index: 1, kind: input, shape index: {}]
  %s2 = inlined_call_operand.vmem [shape: f32[8,1], index: 2, kind: output, shape index: {}]
  %s3 = sld [smem:[#allocation0]]
  $region22: #{tpu_custom_call.1} parent=0
    _
  %s5 = ssub.s32 1, %s3
  %s6 = scalar_select 0, %s5, %s3
  $region1: #{tpu_custom_call.1} parent=0
    #allocation2 [shape = 'u8[4096]{0}', space=vmem, size = 0x1000, scoped, tag = 'input window, operand 0, single buffered']
    #allocation3 [shape = 's32[1]{0}', space=sflag, size = 0x4, scoped, tag = 'scoped memory for tpu_custom_call.1']
    %7 = vsyncpa [#allocation3], 0
    // Predicated region
    $region2: #{tpu_custom_call.1} parent=1 // pred_check
      _
    $region3: #{tpu_custom_call.1} parent=1 // pred_check_branch
      %9 = sbr.rel (0) target = $region5
    $region4: #{tpu_custom_call.1} parent=1 // pred_region
      %s11 = ssub.s32 128, 128
      %12 = vsyncadd [#allocation3], %s11
      %s14 = sshll.u32 [#allocation2], 4
      %s15 = int_to_ptr.vmem [resolvable:$true] %s14
      %17 = dma.hbm_to_vmem [thread:$0]  %s0, 128, %s15, [#allocation3]
    $region5: #{tpu_custom_call.1} parent=1 // pred_fallthru
      _
    // Predicated region
    $region6: #{tpu_custom_call.1} parent=1 // pred_check
      _
    $region7: #{tpu_custom_call.1} parent=1 // pred_check_branch
      %19 = sbr.rel (0) target = $region9
    $region8: #{tpu_custom_call.1} parent=1 // pred_region
      _
    $region9: #{tpu_custom_call.1} parent=1 // pred_fallthru
      _
    // Predicated region
    $region10: #{tpu_custom_call.1} parent=1 // pred_check
      _
    $region11: #{tpu_custom_call.1} parent=1 // pred_check_branch
      %21 = sbr.rel (0) target = $region13
    $region12: #{tpu_custom_call.1} parent=1 // pred_region
      %22 = dma.done [#allocation3], 128
    $region13: #{tpu_custom_call.1} parent=1 // pred_fallthru
      _
    %v23 = vld [vmem:[#allocation2] sm:$0xff]
    %v24 = vld [vmem:[%s1] sm:$0x1]
    %v26 = vlaneseq
    %v27 = vshrl.u32 %v26, 7
    %v28 = vsub.s32 0, %v27
    %v29 = vrot.slane %v24, %v28
    %v31 = vmul.f32 %v23, %v29
    %vm32 = vcmask 261120
    %v33 = vsel %vm32, %v31, 0.0
    %34 = vadd.xlane.f32.xlu0 %v33
    %v35 = vpop.xlane.xlu0 %34
    %vm36 = vcmask 7168
    %37 = vst.msk [vmem:[%s2] sm:$0xff] %vm36, %v35
    // Predicated region
    $region14: #{tpu_custom_call.1} parent=1 // pred_check
      _
    $region15: #{tpu_custom_call.1} parent=1 // pred_check_branch
      %39 = sbr.rel (0) target = $region17
    $region16: #{tpu_custom_call.1} parent=1 // pred_region
      _
    $region17: #{tpu_custom_call.1} parent=1 // pred_fallthru
      _
    // Predicated region
    $region18: #{tpu_custom_call.1} parent=1 // pred_check
      _
    $region19: #{tpu_custom_call.1} parent=1 // pred_check_branch
      %41 = sbr.rel (0) target = $region21
    $region20: #{tpu_custom_call.1} parent=1 // pred_region
      _
    $region21: #{tpu_custom_call.1} parent=1 // pred_fallthru
      _
    %42 = vsyncpa [#allocation3], 1

</llo_original>
